<compile_context>
chip_gen: v7x
topology: tpu7x:2x2x1
jax: 0.10.0
libtpu: 0.0.40
codegen_flags: <defaults>
</compile_context>

<pallas_src>
import jax
import jax.numpy as jnp
from jax.experimental import pallas as pl
from jax.experimental.pallas import tpu as pltpu


def _round_up(n, m):
    return ((n + m - 1) // m) * m


def _fused_gather_kernel(ids_ref, tbl_ref, out_ref):
    """out[i, :] = hi[ids[i], :] + lo[ids[i], :] via ONE one-hot MXU matmul.

    ids_ref : (n_pad, 1)        int32, ids already offset into the fused table
    tbl_ref : (v_total, 2*d)    bf16,  [hi | lo] along the feature axis
    out_ref : (n_pad, d)        f32
    """
    ids = ids_ref[...]                                   # (n_pad, 1)
    n_pad = ids.shape[0]
    v_tot = tbl_ref.shape[0]
    col = jax.lax.broadcasted_iota(jnp.int32, (n_pad, v_tot), 1)
    # Compare in int32 (v5e has no bf16 VPU path); direct bool->bf16 cast —
    # no intermediate f32 one-hot pass.  Out-of-range ids select no row and
    # produce a zero output row (no OOB memory access is possible here).
    onehot = (ids == col).astype(jnp.bfloat16)
    # Single matmul over the block-diagonal fused table; K = v_total (>=384)
    # keeps the 256-deep MXU (v6e/v7x) fully fed; f32 accumulate.
    res = jnp.dot(onehot, tbl_ref[...], preferred_element_type=jnp.float32)
    d = res.shape[1] // 2
    # Recombine hi + lo residual: one cheap VPU add instead of a second matmul.
    out_ref[...] = res[:, :d] + res[:, d:]


def fused_embedding_lookup(ids_flat, table_hilo, d):
    """Gather rows of the fused hi/lo table for a flat vector of (offset) ids."""
    n = ids_flat.shape[0]
    n_p = _round_up(max(n, 1), 8)                        # sublane-dense rows
    ids = jnp.pad(ids_flat.astype(jnp.int32), (0, n_p - n)).reshape(n_p, 1)
    vmem = pltpu.MemorySpace.VMEM
    out = pl.pallas_call(
        _fused_gather_kernel,
        out_shape=jax.ShapeDtypeStruct((n_p, d), jnp.float32),
        in_specs=[pl.BlockSpec(memory_space=vmem),
                  pl.BlockSpec(memory_space=vmem)],
        out_specs=pl.BlockSpec(memory_space=vmem),
    )(ids, table_hilo)
    return out[:n]


def _pad_hilo(table_f32, v_pad):
    """Zero-pad vocab to v_pad and return bf16 [hi | lo] of shape (v_pad, 2d)."""
    t = jnp.pad(table_f32, ((0, v_pad - table_f32.shape[0]), (0, 0)))
    hi = t.astype(jnp.bfloat16)
    lo = (t - hi.astype(jnp.float32)).astype(jnp.bfloat16)
    return jnp.concatenate([hi, lo], axis=1)


class InputEmbedding:
    """JAX/Pallas port of DIN InputEmbedding (three nn.Embedding tables).

    All lookups are fused into ONE kernel launch: ids for every table are
    offset into a single block-stacked table, gathered once with one MXU
    matmul, and split back in the wrapper.
    """

    def __init__(self, n_uid, n_mid, n_cid, embedding_dim, key):
        ku, km, kc = jax.random.split(key, 3)
        self.d = embedding_dim
        # nn.Embedding default init ~ N(0, 1); deterministic via PRNGKey.
        self.user_table = jax.random.normal(ku, (n_uid, embedding_dim), jnp.float32)
        self.material_table = jax.random.normal(km, (n_mid, embedding_dim), jnp.float32)
        self.category_table = jax.random.normal(kc, (n_cid, embedding_dim), jnp.float32)

        # Hoisted once: padded vocabs + hi/lo bf16 split + block-wise fusion.
        self.vu_p = _round_up(n_uid, 128)
        self.vm_p = _round_up(n_mid, 128)
        self.vc_p = _round_up(n_cid, 128)
        self.table_hilo = jnp.concatenate(
            [_pad_hilo(self.user_table, self.vu_p),
             _pad_hilo(self.material_table, self.vm_p),
             _pad_hilo(self.category_table, self.vc_p)], axis=0)
        # Row offsets of each logical table inside the fused table.
        self.off_u = 0
        self.off_m = self.vu_p
        self.off_c = self.vu_p + self.vm_p

    def __call__(self, user, material, category,
                 material_historical, category_historical,
                 material_historical_neg, category_historical_neg,
                 neg_sample=False):
        d = self.d

        # Flatten + offset every id tensor into the fused vocab space, in a
        # fixed order so the wrapper can split the single output slab back.
        parts = [
            (user, self.off_u),
            (material, self.off_m),
            (material_historical, self.off_m),
            (category, self.off_c),
            (category_historical, self.off_c),
        ]
        if neg_sample:
            parts.append((material_historical_neg, self.off_m))
            parts.append((category_historical_neg, self.off_c))

        flat_ids = jnp.concatenate(
            [p.reshape(-1).astype(jnp.int32) + off for p, off in parts])

        emb = fused_embedding_lookup(flat_ids, self.table_hilo, d)

        # Split back.
        outs = []
        pos = 0
        for p, _ in parts:
            n = p.size
            outs.append(emb[pos:pos + n].reshape(p.shape + (d,)))
            pos += n

        user_embedding = outs[0]
        material_embedding = outs[1]
        material_historical_embedding = outs[2]
        category_embedding = outs[3]
        category_historical_embedding = outs[4]
        if neg_sample:
            material_historical_neg_embedding = outs[5]
            category_historical_neg_embedding = outs[6]
        else:
            material_historical_neg_embedding = None
            category_historical_neg_embedding = None

        ans = [user_embedding, material_historical_embedding,
               category_historical_embedding, material_embedding,
               category_embedding, material_historical_neg_embedding,
               category_historical_neg_embedding]
        # PyTorch: x.squeeze() if x != None else None
        return tuple(jnp.squeeze(x) if x is not None else None for x in ans)


if __name__ == "__main__":
    key = jax.random.PRNGKey(0)
    k_mod, k_u, k_m, k_c, k_mh, k_ch, k_mn, k_cn = jax.random.split(key, 8)

    n_uid, n_mid, n_cid, embedding_dim = 64, 100, 20, 32
    B, T = 2, 8

    model = InputEmbedding(n_uid, n_mid, n_cid, embedding_dim, k_mod)

    user = jax.random.randint(k_u, (B,), 0, n_uid, jnp.int32)
    material = jax.random.randint(k_m, (B,), 0, n_mid, jnp.int32)
    category = jax.random.randint(k_c, (B,), 0, n_cid, jnp.int32)
    material_historical = jax.random.randint(k_mh, (B, T), 0, n_mid, jnp.int32)
    category_historical = jax.random.randint(k_ch, (B, T), 0, n_cid, jnp.int32)
    material_historical_neg = jax.random.randint(k_mn, (B, T), 0, n_mid, jnp.int32)
    category_historical_neg = jax.random.randint(k_cn, (B, T), 0, n_cid, jnp.int32)

    def reference(neg):
        return (
            jnp.squeeze(model.user_table[user]),
            jnp.squeeze(model.material_table[material_historical]),
            jnp.squeeze(model.category_table[category_historical]),
            jnp.squeeze(model.material_table[material]),
            jnp.squeeze(model.category_table[category]),
            jnp.squeeze(model.material_table[material_historical_neg]) if neg else None,
            jnp.squeeze(model.category_table[category_historical_neg]) if neg else None,
        )

    # Tolerance: hi/lo bf16 split bounds the gather error at ~2^-16 * |value|.
    RTOL, ATOL = 1e-4, 1e-5

    for neg in (False, True):
        outs = model(user, material, category,
                     material_historical, category_historical,
                     material_historical_neg, category_historical_neg,
                     neg_sample=neg)
        for o in outs:
            if o is not None:
                jax.block_until_ready(o)
        for got, want in zip(outs, reference(neg)):
            if want is None:
                assert got is None
            else:
                assert got.shape == want.shape, (got.shape, want.shape)
                assert jnp.allclose(got, want, rtol=RTOL, atol=ATOL), \
                    "mismatch vs reference gather"

    print("KERNEL_OK")
</pallas_src>

<mosaic_0001>
module attributes {stable_mosaic.version = 11 : i64} {
  func.func @_fused_gather_kernel(%arg0: memref<40x1xi32, #tpu.memory_space<vmem>>, %arg1: memref<384x64xbf16, #tpu.memory_space<vmem>>, %arg2: memref<40x32xf32, #tpu.memory_space<vmem>>) attributes {dimension_semantics = [], scalar_prefetch = 0 : i64, scratch_operands = 0 : i64, tpu.core_type = #tpu.core_type<tc>} {
    %c0 = arith.constant 0 : index
    %c0_0 = arith.constant 0 : index
    %0 = vector.load %arg0[%c0, %c0_0] : memref<40x1xi32, #tpu.memory_space<vmem>>, vector<40x1xi32>
    %1 = tpu.iota {dimensions = array<i32: 1>} : vector<40x384xi32>
    %2 = vector.broadcast %0 : vector<40x1xi32> to vector<40x384xi32>
    %3 = arith.cmpi eq, %2, %1 : vector<40x384xi32>
    %4 = arith.extui %3 : vector<40x384xi1> to vector<40x384xi32>
    %5 = arith.sitofp %4 : vector<40x384xi32> to vector<40x384xf32>
    %6 = arith.truncf %5 : vector<40x384xf32> to vector<40x384xbf16>
    %c0_1 = arith.constant 0 : index
    %c0_2 = arith.constant 0 : index
    %7 = vector.load %arg1[%c0_1, %c0_2] : memref<384x64xbf16, #tpu.memory_space<vmem>>, vector<384x64xbf16>
    %cst = arith.constant dense<0.000000e+00> : vector<40x64xf32>
    %8 = tpu.matmul %6, %7, %cst {dimension_numbers = #tpu.dot_dimension_numbers<[1], [0], [0], [1], [0, 0, 1, 1], [], []>} : vector<40x384xbf16>, vector<384x64xbf16>, vector<40x64xf32> -> vector<40x64xf32>
    %9 = vector.extract_strided_slice %8 {offsets = [0, 0], sizes = [40, 32], strides = [1, 1]} : vector<40x64xf32> to vector<40x32xf32>
    %10 = vector.extract_strided_slice %8 {offsets = [0, 32], sizes = [40, 32], strides = [1, 1]} : vector<40x64xf32> to vector<40x32xf32>
    %11 = arith.addf %9, %10 : vector<40x32xf32>
    %c0_3 = arith.constant 0 : index
    %c0_4 = arith.constant 0 : index
    %12 = vector.load %arg2[%c0_3, %c0_4] : memref<40x32xf32, #tpu.memory_space<vmem>>, vector<40x32xf32>
    tpu.vector_store %arg2[%c0_3, %c0_4], %11 {strides = array<i32>} : memref<40x32xf32, #tpu.memory_space<vmem>>, vector<40x32xf32>,
    return
  }
}

</mosaic_0001>

<llo_original>
// kernel: tpu_custom_call.1
$region0: #{tpu_custom_call.1}
  #allocation0 [shape = 'u32[]', space=smem, size = 0x4, offset = 0x4, fixed_abs, tag = 'smem constant byte address 0x4 - core index']
  #allocation1 [shape = 'u32[144,128]{1,0:T(1,128)}', space=vmem, size = 0x12000, scoped, tag = 'internal scratch']
  %s0 = inlined_call_operand.vmem [shape: s32[40,1], index: 0, kind: input, shape index: {}]
  %s1 = inlined_call_operand.vmem [shape: bf16[384,64], index: 1, kind: input, shape index: {}]
  %s2 = inlined_call_operand.vmem [shape: f32[40,32], index: 2, kind: output, shape index: {}]
  %s3 = sld [smem:[#allocation0]]
  $region18: #{tpu_custom_call.1} parent=0
    _
  %s5 = ssub.s32 1, %s3
  %s6 = scalar_select 0, %s5, %s3
  // Predicated region
  $region2: #{tpu_custom_call.1} parent=0 // pred_check
    _
  $region3: #{tpu_custom_call.1} parent=0 // pred_check_branch
    %8 = sbr.rel (0) target = $region5
  $region4: #{tpu_custom_call.1} parent=0 // pred_region
    _
  $region5: #{tpu_custom_call.1} parent=0 // pred_fallthru
    _
  // Predicated region
  $region6: #{tpu_custom_call.1} parent=0 // pred_check
    _
  $region7: #{tpu_custom_call.1} parent=0 // pred_check_branch
    %10 = sbr.rel (0) target = $region9
  $region8: #{tpu_custom_call.1} parent=0 // pred_region
    _
  $region9: #{tpu_custom_call.1} parent=0 // pred_fallthru
    _
  %v12 = vld [vmem:[%s0] sm:$0xff]
  %v13 = vld [vmem:[%s0 + $0x8] sm:$0xff]
  %v14 = vld [vmem:[%s0 + $0x10] sm:$0xff]
  %v15 = vld [vmem:[%s0 + $0x18] sm:$0xff]
  %v16 = vld [vmem:[%s0 + $0x20] sm:$0xff]
  %v17 = vlaneseq
  %v18 = vand.u32 %v17, 127
  %v19 = vadd.s32 %v18, 128
  %v20 = vadd.s32 %v18, 256
  %21 = vset.pattern.permute.xlu0 0
  %22 = vperm.xlu0 %21, %v12
  %v23 = vpop.permute.xlu0 %22
  %24 = vset.pattern.permute.xlu0 0
  %25 = vperm.xlu0 %24, %v13
  %v26 = vpop.permute.xlu0 %25
  %27 = vset.pattern.permute.xlu0 0
  %28 = vperm.xlu0 %27, %v14
  %v29 = vpop.permute.xlu0 %28
  %30 = vset.pattern.permute.xlu0 0
  %31 = vperm.xlu0 %30, %v15
  %v32 = vpop.permute.xlu0 %31
  %33 = vset.pattern.permute.xlu0 0
  %34 = vperm.xlu0 %33, %v16
  %v35 = vpop.permute.xlu0 %34
  %vm36 = vcmp.eq.s32.totalorder %v23, %v18
  %vm37 = vcmp.eq.s32.totalorder %v23, %v19
  %vm38 = vcmp.eq.s32.totalorder %v23, %v20
  %vm39 = vcmp.eq.s32.totalorder %v26, %v18
  %vm40 = vcmp.eq.s32.totalorder %v26, %v19
  %vm41 = vcmp.eq.s32.totalorder %v26, %v20
  %vm42 = vcmp.eq.s32.totalorder %v29, %v18
  %vm43 = vcmp.eq.s32.totalorder %v29, %v19
  %vm44 = vcmp.eq.s32.totalorder %v29, %v20
  %vm45 = vcmp.eq.s32.totalorder %v32, %v18
  %vm46 = vcmp.eq.s32.totalorder %v32, %v19
  %vm47 = vcmp.eq.s32.totalorder %v32, %v20
  %vm48 = vcmp.eq.s32.totalorder %v35, %v18
  %vm49 = vcmp.eq.s32.totalorder %v35, %v19
  %vm50 = vcmp.eq.s32.totalorder %v35, %v20
  %v51 = vsel %vm36, 1, 0
  %v52 = vsel %vm37, 1, 0
  %v53 = vsel %vm38, 1, 0
  %v54 = vsel %vm39, 1, 0
  %v55 = vsel %vm40, 1, 0
  %v56 = vsel %vm41, 1, 0
  %v57 = vsel %vm42, 1, 0
  %v58 = vsel %vm43, 1, 0
  %v59 = vsel %vm44, 1, 0
  %v60 = vsel %vm45, 1, 0
  %v61 = vsel %vm46, 1, 0
  %v62 = vsel %vm47, 1, 0
  %v63 = vsel %vm48, 1, 0
  %v64 = vsel %vm49, 1, 0
  %v65 = vsel %vm50, 1, 0
  %v66 = vcvt.s32.f32 %v51
  %v67 = vcvt.s32.f32 %v52
  %v68 = vcvt.s32.f32 %v53
  %v69 = vcvt.s32.f32 %v54
  %v70 = vcvt.s32.f32 %v55
  %v71 = vcvt.s32.f32 %v56
  %v72 = vcvt.s32.f32 %v57
  %v73 = vcvt.s32.f32 %v58
  %v74 = vcvt.s32.f32 %v59
  %v75 = vcvt.s32.f32 %v60
  %v76 = vcvt.s32.f32 %v61
  %v77 = vcvt.s32.f32 %v62
  %v78 = vcvt.s32.f32 %v63
  %v79 = vcvt.s32.f32 %v64
  %v80 = vcvt.s32.f32 %v65
  %v81 = vpack.c.bf16 %v69, %v66
  %v82 = vpack.c.bf16 %v70, %v67
  %v83 = vpack.c.bf16 %v71, %v68
  %v84 = vpack.c.bf16 %v75, %v72
  %v85 = vpack.c.bf16 %v76, %v73
  %v86 = vpack.c.bf16 %v77, %v74
  %v87 = vpack.c.bf16 %v78, %v78
  %v88 = vpack.c.bf16 %v79, %v79
  %v89 = vpack.c.bf16 %v80, %v80
  %v90 = vld [vmem:[%s1] sm:$0xf]
  %v91 = vld [vmem:[%s1 + $0x4] sm:$0xf]
  %v92 = vld [vmem:[%s1 + $0x8] sm:$0xf]
  %v93 = vld [vmem:[%s1 + $0xc] sm:$0xf]
  %v94 = vld [vmem:[%s1 + $0x10] sm:$0xf]
  %v95 = vld [vmem:[%s1 + $0x14] sm:$0xf]
  %v96 = vld [vmem:[%s1 + $0x18] sm:$0xf]
  %v97 = vld [vmem:[%s1 + $0x1c] sm:$0xf]
  %v98 = vld [vmem:[%s1 + $0x20] sm:$0xf]
  %v99 = vld [vmem:[%s1 + $0x24] sm:$0xf]
  %v100 = vld [vmem:[%s1 + $0x28] sm:$0xf]
  %v101 = vld [vmem:[%s1 + $0x2c] sm:$0xf]
  %v102 = vld [vmem:[%s1 + $0x30] sm:$0xf]
  %v103 = vld [vmem:[%s1 + $0x34] sm:$0xf]
  %v104 = vld [vmem:[%s1 + $0x38] sm:$0xf]
  %v105 = vld [vmem:[%s1 + $0x3c] sm:$0xf]
  %v106 = vld [vmem:[%s1 + $0x40] sm:$0xf]
  %v107 = vld [vmem:[%s1 + $0x44] sm:$0xf]
  %v108 = vld [vmem:[%s1 + $0x48] sm:$0xf]
  %v109 = vld [vmem:[%s1 + $0x4c] sm:$0xf]
  %v110 = vld [vmem:[%s1 + $0x50] sm:$0xf]
  %v111 = vld [vmem:[%s1 + $0x54] sm:$0xf]
  %v112 = vld [vmem:[%s1 + $0x58] sm:$0xf]
  %v113 = vld [vmem:[%s1 + $0x5c] sm:$0xf]
  %v114 = vld [vmem:[%s1 + $0x60] sm:$0xf]
  %v115 = vld [vmem:[%s1 + $0x64] sm:$0xf]
  %v116 = vld [vmem:[%s1 + $0x68] sm:$0xf]
  %v117 = vld [vmem:[%s1 + $0x6c] sm:$0xf]
  %v118 = vld [vmem:[%s1 + $0x70] sm:$0xf]
  %v119 = vld [vmem:[%s1 + $0x74] sm:$0xf]
  %v120 = vld [vmem:[%s1 + $0x78] sm:$0xf]
  %v121 = vld [vmem:[%s1 + $0x7c] sm:$0xf]
  %v122 = vld [vmem:[%s1 + $0x80] sm:$0xf]
  %v123 = vld [vmem:[%s1 + $0x84] sm:$0xf]
  %v124 = vld [vmem:[%s1 + $0x88] sm:$0xf]
  %v125 = vld [vmem:[%s1 + $0x8c] sm:$0xf]
  %v126 = vld [vmem:[%s1 + $0x90] sm:$0xf]
  %v127 = vld [vmem:[%s1 + $0x94] sm:$0xf]
  %v128 = vld [vmem:[%s1 + $0x98] sm:$0xf]
  %v129 = vld [vmem:[%s1 + $0x9c] sm:$0xf]
  %v130 = vld [vmem:[%s1 + $0xa0] sm:$0xf]
  %v131 = vld [vmem:[%s1 + $0xa4] sm:$0xf]
  %v132 = vld [vmem:[%s1 + $0xa8] sm:$0xf]
  %v133 = vld [vmem:[%s1 + $0xac] sm:$0xf]
  %v134 = vld [vmem:[%s1 + $0xb0] sm:$0xf]
  %v135 = vld [vmem:[%s1 + $0xb4] sm:$0xf]
  %v136 = vld [vmem:[%s1 + $0xb8] sm:$0xf]
  %v137 = vld [vmem:[%s1 + $0xbc] sm:$0xf]
  %v186 = vunpack.c.l.b16 %v90
  %v187 = vunpack.c.l.b16 %v91
  %v188 = vunpack.c.l.b16 %v92
  %v189 = vunpack.c.l.b16 %v93
  %v190 = vunpack.c.l.b16 %v94
  %v191 = vunpack.c.l.b16 %v95
  %v192 = vunpack.c.l.b16 %v96
  %v193 = vunpack.c.l.b16 %v97
  %v194 = vunpack.c.l.b16 %v98
  %v195 = vunpack.c.l.b16 %v99
  %v196 = vunpack.c.l.b16 %v100
  %v197 = vunpack.c.l.b16 %v101
  %v198 = vunpack.c.l.b16 %v102
  %v199 = vunpack.c.l.b16 %v103
  %v200 = vunpack.c.l.b16 %v104
  %v201 = vunpack.c.l.b16 %v105
  %v202 = vunpack.c.l.b16 %v106
  %v203 = vunpack.c.l.b16 %v107
  %v204 = vunpack.c.l.b16 %v108
  %v205 = vunpack.c.l.b16 %v109
  %v206 = vunpack.c.l.b16 %v110
  %v207 = vunpack.c.l.b16 %v111
  %v208 = vunpack.c.l.b16 %v112
  %v209 = vunpack.c.l.b16 %v113
  %v210 = vunpack.c.l.b16 %v114
  %v211 = vunpack.c.l.b16 %v115
  %v212 = vunpack.c.l.b16 %v116
  %v213 = vunpack.c.l.b16 %v117
  %v214 = vunpack.c.l.b16 %v118
  %v215 = vunpack.c.l.b16 %v119
  %v216 = vunpack.c.l.b16 %v120
  %v217 = vunpack.c.l.b16 %v121
  %v218 = vunpack.c.l.b16 %v122
  %v219 = vunpack.c.l.b16 %v123
  %v220 = vunpack.c.l.b16 %v124
  %v221 = vunpack.c.l.b16 %v125
  %v222 = vunpack.c.l.b16 %v126
  %v223 = vunpack.c.l.b16 %v127
  %v224 = vunpack.c.l.b16 %v128
  %v225 = vunpack.c.l.b16 %v129
  %v226 = vunpack.c.l.b16 %v130
  %v227 = vunpack.c.l.b16 %v131
  %v228 = vunpack.c.l.b16 %v132
  %v229 = vunpack.c.l.b16 %v133
  %v230 = vunpack.c.l.b16 %v134
  %v231 = vunpack.c.l.b16 %v135
  %v232 = vunpack.c.l.b16 %v136
  %v233 = vunpack.c.l.b16 %v137
  %v234 = vpack.c.b16 %v187, %v186
  %v235 = vpack.c.b16 %v189, %v188
  %v236 = vpack.c.b16 %v191, %v190
  %v237 = vpack.c.b16 %v193, %v192
  %v238 = vpack.c.b16 %v195, %v194
  %v239 = vpack.c.b16 %v197, %v196
  %v240 = vpack.c.b16 %v199, %v198
  %v241 = vpack.c.b16 %v201, %v200
  %v242 = vpack.c.b16 %v203, %v202
  %v243 = vpack.c.b16 %v205, %v204
  %v244 = vpack.c.b16 %v207, %v206
  %v245 = vpack.c.b16 %v209, %v208
  %v246 = vpack.c.b16 %v211, %v210
  %v247 = vpack.c.b16 %v213, %v212
  %v248 = vpack.c.b16 %v215, %v214
  %v249 = vpack.c.b16 %v217, %v216
  %v250 = vpack.c.b16 %v219, %v218
  %v251 = vpack.c.b16 %v221, %v220
  %v252 = vpack.c.b16 %v223, %v222
  %v253 = vpack.c.b16 %v225, %v224
  %v254 = vpack.c.b16 %v227, %v226
  %v255 = vpack.c.b16 %v229, %v228
  %v256 = vpack.c.b16 %v231, %v230
  %v257 = vpack.c.b16 %v233, %v232
  %282 = vmatprep.subr.bf16.mxu0 0
  %283 = vmatpush1.bf16.msra.mxu0 %v234
  %284 = vmatprep.subr.bf16.mxu0 0
  %285 = vmatpush1.bf16.msra.mxu0 %v235
  %286 = vmatprep.subr.bf16.mxu0 0
  %287 = vmatpush1.bf16.msra.mxu0 %v236
  %288 = vmatprep.subr.bf16.mxu0 0
  %289 = vmatpush1.bf16.msra.mxu0 %v237
  %290 = vmatprep.subr.bf16.mxu0 0
  %291 = vmatpush1.bf16.msra.mxu0 %v238
  %292 = vmatprep.subr.bf16.mxu0 0
  %293 = vmatpush1.bf16.msra.mxu0 %v239
  %294 = vmatprep.subr.bf16.mxu0 0
  %295 = vmatpush1.bf16.msra.mxu0 %v240
  %296 = vmatprep.subr.bf16.mxu0 0
  %297 = vmatpush1.bf16.msra.mxu0 %v241
  %298 = vmatprep.subr.bf16.mxu0 0
  %299 = vmatpush1.bf16.msra.mxu0 %v242
  %300 = vmatprep.subr.bf16.mxu0 0
  %301 = vmatpush1.bf16.msra.mxu0 %v243
  %302 = vmatprep.subr.bf16.mxu0 0
  %303 = vmatpush1.bf16.msra.mxu0 %v244
  %304 = vmatprep.subr.bf16.mxu0 0
  %305 = vmatpush1.bf16.msra.mxu0 %v245
  %306 = vmatprep.subr.bf16.mxu0 0
  %307 = vmatpush1.bf16.msra.mxu0 %v246
  %308 = vmatprep.subr.bf16.mxu0 0
  %309 = vmatpush1.bf16.msra.mxu0 %v247
  %310 = vmatprep.subr.bf16.mxu0 0
  %311 = vmatpush1.bf16.msra.mxu0 %v248
  %312 = vmatprep.subr.bf16.mxu0 0
  %313 = vmatpush1.bf16.msra.mxu0 %v249
  %314 = vmatprep.mubr.bf16.mxu0 %v82
  %315 = vmatmul.mubr.bf16.gmra.mrb[0].mxu0 %v81
  %v316 = vpop.f32.mrb[0].mxu0
  %v317 = vadd.f32 0.0, %v316
  %v318 = vpop.f32.mrb[0].mxu0
  %v319 = vpop.f32.mrb[0].mxu0
  %v320 = vadd.f32 0.0, %v319
  %v321 = vpop.f32.mrb[0].mxu0
  %322 = vmatprep.mubr.bf16.mxu0 %v85
  %323 = vmatmul.mubr.bf16.gmra.mrb[0].mxu0 %v84
  %v324 = vpop.f32.mrb[0].mxu0
  %v325 = vadd.f32 0.0, %v324
  %v326 = vpop.f32.mrb[0].mxu0
  %v327 = vpop.f32.mrb[0].mxu0
  %v328 = vadd.f32 0.0, %v327
  %v329 = vpop.f32.mrb[0].mxu0
  %330 = vmatprep.mubr.bf16.mxu0 %v88
  %331 = vmatmul.mubr.bf16.gmra.mrb[0].mxu0 %v87
  %v332 = vpop.f32.mrb[0].mxu0
  %v333 = vadd.f32 0.0, %v332
  %v334 = vpop.f32.mrb[0].mxu0
  %v335 = vpop.f32.mrb[0].mxu0
  %v336 = vpop.f32.mrb[0].mxu0
  %337 = vdwg.mxu0
  %338 = vmatprep.subr.bf16.mxu0 0
  %339 = vmatpush1.bf16.msra.mxu0 %v250
  %340 = vmatprep.subr.bf16.mxu0 0
  %341 = vmatpush1.bf16.msra.mxu0 %v251
  %342 = vmatprep.subr.bf16.mxu0 0
  %343 = vmatpush1.bf16.msra.mxu0 %v252
  %344 = vmatprep.subr.bf16.mxu0 0
  %345 = vmatpush1.bf16.msra.mxu0 %v253
  %346 = vmatprep.subr.bf16.mxu0 0
  %347 = vmatpush1.bf16.msra.mxu0 %v254
  %348 = vmatprep.subr.bf16.mxu0 0
  %349 = vmatpush1.bf16.msra.mxu0 %v255
  %350 = vmatprep.subr.bf16.mxu0 0
  %351 = vmatpush1.bf16.msra.mxu0 %v256
  %352 = vmatprep.subr.bf16.mxu0 0
  %353 = vmatpush1.bf16.msra.mxu0 %v257
  %354 = vmatprep.subr.bf16.mxu0 0
  %355 = vmatpush1.bf16.msra.mxu0 0
  %356 = vmatprep.subr.bf16.mxu0 0
  %357 = vmatpush1.bf16.msra.mxu0 0
  %358 = vmatprep.subr.bf16.mxu0 0
  %359 = vmatpush1.bf16.msra.mxu0 0
  %360 = vmatprep.subr.bf16.mxu0 0
  %361 = vmatpush1.bf16.msra.mxu0 0
  %362 = vmatprep.subr.bf16.mxu0 0
  %363 = vmatpush1.bf16.msra.mxu0 0
  %364 = vmatprep.subr.bf16.mxu0 0
  %365 = vmatpush1.bf16.msra.mxu0 0
  %366 = vmatprep.subr.bf16.mxu0 0
  %367 = vmatpush1.bf16.msra.mxu0 0
  %368 = vmatprep.subr.bf16.mxu0 0
  %369 = vmatpush1.bf16.msra.mxu0 0
  %370 = vmatprep.mubr.bf16.mxu0 0
  %371 = vmatmul.mubr.bf16.gmra.mrb[0].mxu0 %v83
  %v372 = vpop.f32.mrb[0].mxu0
  %v373 = vadd.f32 %v317, %v372
  %v374 = vpop.f32.mrb[0].mxu0
  %v375 = vpop.f32.mrb[0].mxu0
  %v376 = vadd.f32 %v320, %v375
  %v377 = vpop.f32.mrb[0].mxu0
  %378 = vmatprep.mubr.bf16.mxu0 0
  %379 = vmatmul.mubr.bf16.gmra.mrb[0].mxu0 %v86
  %v380 = vpop.f32.mrb[0].mxu0
  %v381 = vadd.f32 %v325, %v380
  %v382 = vpop.f32.mrb[0].mxu0
  %v383 = vpop.f32.mrb[0].mxu0
  %v384 = vadd.f32 %v328, %v383
  %v385 = vpop.f32.mrb[0].mxu0
  %386 = vmatprep.mubr.bf16.mxu0 0
  %387 = vmatmul.mubr.bf16.gmra.mrb[0].mxu0 %v89
  %v388 = vpop.f32.mrb[0].mxu0
  %v389 = vadd.f32 %v333, %v388
  %v390 = vpop.f32.mrb[0].mxu0
  %v391 = vpop.f32.mrb[0].mxu0
  %v392 = vpop.f32.mrb[0].mxu0
  %393 = vdwg.mxu0
  %399 = vrot.lane.b32.xlu0 %v373, 96
  %v400 = vpop.permute.xlu0 %399
  %401 = vrot.lane.b32.xlu0 %v376, 96
  %v402 = vpop.permute.xlu0 %401
  %403 = vrot.lane.b32.xlu0 %v381, 96
  %v404 = vpop.permute.xlu0 %403
  %405 = vrot.lane.b32.xlu0 %v384, 96
  %v406 = vpop.permute.xlu0 %405
  %407 = vrot.lane.b32.xlu0 %v389, 96
  %v408 = vpop.permute.xlu0 %407
  %v414 = vadd.f32 %v373, %v400
  %v415 = vadd.f32 %v376, %v402
  %v416 = vadd.f32 %v381, %v404
  %v417 = vadd.f32 %v384, %v406
  %v418 = vadd.f32 %v389, %v408
  %vm419 = vcmask 261120
  %420 = vst.msk [vmem:[%s2] sm:$0xff] %vm419, %v414
  %421 = vst.msk [vmem:[%s2 + $0x8] sm:$0xff] %vm419, %v415
  %422 = vst.msk [vmem:[%s2 + $0x10] sm:$0xff] %vm419, %v416
  %423 = vst.msk [vmem:[%s2 + $0x18] sm:$0xff] %vm419, %v417
  %424 = vst.msk [vmem:[%s2 + $0x20] sm:$0xff] %vm419, %v418
  // Predicated region
  $region10: #{tpu_custom_call.1} parent=0 // pred_check
    _
  $region11: #{tpu_custom_call.1} parent=0 // pred_check_branch
    %426 = sbr.rel (0) target = $region13
  $region12: #{tpu_custom_call.1} parent=0 // pred_region
    _
  $region13: #{tpu_custom_call.1} parent=0 // pred_fallthru
    _
  // Predicated region
  $region14: #{tpu_custom_call.1} parent=0 // pred_check
    _
  $region15: #{tpu_custom_call.1} parent=0 // pred_check_branch
    %428 = sbr.rel (0) target = $region17
  $region16: #{tpu_custom_call.1} parent=0 // pred_region
    _
  $region17: #{tpu_custom_call.1} parent=0 // pred_fallthru
    _

</llo_original>
